<compile_context>
chip_gen: v6e
topology: v6e:2x2x1
jax: 0.10.0
libtpu: 0.0.40
codegen_flags: <defaults>
</compile_context>

<pallas_src>
import functools

import jax
import jax.numpy as jnp
from jax.experimental import pallas as pl
from jax.experimental.pallas import tpu as pltpu

# ---- synthetic config (mirrors `config` used by models.py) ----
R, C = 4, 4                    # board rows / cols
POLICY_HEAD_FILTERS = 8        # conv filters in the policy head
BN_EPS = 1e-5


def policy_head_kernel(x_ref, wconv_ref, seg_ref, segt_ref, gamma_ref,
                       beta_ref, wl_ref, bl_ref, out_ref, *, n, hw):
    """All refs VMEM.
    x_ref:     (N, C_in*HW)   NCHW-contiguous flatten of the input
    wconv_ref: (C_in*HW, F*HW) block-diagonal 1x1-conv weight (bias dropped)
    seg_ref:   (F*HW, F)      per-channel segment-sum matrix
    segt_ref:  (F, F*HW)      its transpose (channel -> lane broadcast)
    gamma_ref: (1, F)         BN weight
    beta_ref:  (1, F*HW)      BN bias, pre-expanded to lanes host-side
    wl_ref:    (F*HW, out)    Linear weight, transposed host-side
    bl_ref:    (1, out)       Linear bias
    out_ref:   (N, out)       softmax(dim=1) output
    """
    cnt = jnp.float32(n * hw)

    # --- phase 1: 1x1 conv + NCHW .view(N,-1) flatten as ONE MXU matmul ---
    y = jnp.dot(x_ref[...], wconv_ref[...],
                preferred_element_type=jnp.float32)            # (N, F*HW)

    # --- phase 2: BN statistics (training mode, two-pass, biased var) ------
    # per-channel sums via segment-sum matmuls on the otherwise-idle MXU
    mean = jnp.sum(jnp.dot(y, seg_ref[...],
                           preferred_element_type=jnp.float32),
                   axis=0, keepdims=True) / cnt                # (1, F)
    mean_b = jnp.dot(mean, segt_ref[...],
                     preferred_element_type=jnp.float32)       # (1, F*HW)
    d = y - mean_b                                             # (N, F*HW)
    var = jnp.sum(jnp.dot(d * d, seg_ref[...],
                          preferred_element_type=jnp.float32),
                  axis=0, keepdims=True) / cnt                 # (1, F)
    scale = gamma_ref[...] * jax.lax.rsqrt(var + BN_EPS)       # gamma folded
    scale_b = jnp.dot(scale, segt_ref[...],
                      preferred_element_type=jnp.float32)      # (1, F*HW)

    # --- phase 3: affine + ReLU, fully in-register, lane-dense -------------
    a = jnp.maximum(d * scale_b + beta_ref[...], 0.0)          # (N, F*HW)

    # --- phase 4: Linear + softmax over dim 1 ------------------------------
    logits = jnp.dot(a, wl_ref[...],
                     preferred_element_type=jnp.float32) + bl_ref[...]
    m = jnp.max(logits, axis=-1, keepdims=True)
    e = jnp.exp(logits - m)
    s = jnp.sum(e, axis=-1, keepdims=True)
    r = pl.reciprocal(s, approx=True)
    r = r * (2.0 - s * r)        # one Newton step -> full f32 precision
    out_ref[...] = e * r


def pack_params(params, r, c):
    """One-time (init-time) repacking of PyTorch-layout parameters into
    kernel-ready lane-dense arrays (hoisted out of the per-call path)."""
    hw = r * c
    nf, cin = params["conv_w"].shape[0], params["conv_w"].shape[1]
    out_dims = params["lin_w"].shape[0]

    wc = params["conv_w"].reshape(nf, cin).astype(jnp.float32)      # (F, C_in)
    eye = jnp.eye(hw, dtype=jnp.float32)
    # Block-diagonal expanded 1x1-conv weight: Wexp[c*HW+p, f*HW+p] = wc[f, c]
    wconv = jnp.einsum("fc,pq->cpfq", wc, eye).reshape(cin * hw, nf * hw)

    # Segment-sum matrices for per-channel BN statistics on the MXU.
    ch = jnp.arange(nf * hw) // hw
    seg = (ch[:, None] == jnp.arange(nf)[None, :]).astype(jnp.float32)  # (F*HW, F)

    return dict(
        wconv=wconv,
        seg=seg,
        seg_t=seg.T,                                                    # (F, F*HW)
        gamma=params["bn_gamma"].astype(jnp.float32).reshape(1, nf),
        beta=jnp.repeat(params["bn_beta"].astype(jnp.float32), hw).reshape(1, nf * hw),
        wl_t=params["lin_w"].astype(jnp.float32).T,                     # (F*HW, out)
        bl=params["lin_b"].astype(jnp.float32).reshape(1, out_dims),
    )


def policy_head_forward(x_nchw, packed):
    n, cin, r, c = x_nchw.shape
    hw = r * c
    out_dims = packed["bl"].shape[1]

    # Contiguous NCHW flatten: pure reshape, no transpose / data movement.
    x2 = x_nchw.reshape(n, cin * hw)

    kernel = functools.partial(policy_head_kernel, n=n, hw=hw)
    vmem = pl.BlockSpec(memory_space=pltpu.MemorySpace.VMEM)

    return pl.pallas_call(
        kernel,
        out_shape=jax.ShapeDtypeStruct((n, out_dims), jnp.float32),
        in_specs=[vmem] * 8,
        out_specs=vmem,
    )(x2, packed["wconv"], packed["seg"], packed["seg_t"],
      packed["gamma"], packed["beta"], packed["wl_t"], packed["bl"])


def init_params(key, in_dims, nf, r, c, out_dims):
    ks = jax.random.split(key, 6)
    return dict(
        conv_w=0.1 * jax.random.normal(ks[0], (nf, in_dims, 1, 1), jnp.float32),
        conv_b=0.1 * jax.random.normal(ks[1], (nf,), jnp.float32),
        bn_gamma=1.0 + 0.1 * jax.random.normal(ks[2], (nf,), jnp.float32),
        bn_beta=0.1 * jax.random.normal(ks[3], (nf,), jnp.float32),
        lin_w=0.05 * jax.random.normal(ks[4], (out_dims, nf * r * c), jnp.float32),
        lin_b=0.05 * jax.random.normal(ks[5], (out_dims,), jnp.float32),
    )


def reference_forward(x_nchw, params):
    """Pure-JAX reference mirroring the PyTorch forward semantics
    (including the conv bias, which training-mode BN cancels exactly)."""
    n, cin, r, c = x_nchw.shape
    nf = params["conv_w"].shape[0]
    w = params["conv_w"].reshape(nf, cin)
    y = jnp.einsum("nchw,fc->nfhw", x_nchw, w) + params["conv_b"][None, :, None, None]
    mean = jnp.mean(y, axis=(0, 2, 3))
    var = jnp.mean((y - mean[None, :, None, None]) ** 2, axis=(0, 2, 3))
    y = (y - mean[None, :, None, None]) * jax.lax.rsqrt(var + BN_EPS)[None, :, None, None]
    y = y * params["bn_gamma"][None, :, None, None] + params["bn_beta"][None, :, None, None]
    y = jnp.maximum(y, 0.0)
    logits = y.reshape(n, -1) @ params["lin_w"].T + params["lin_b"]
    return jax.nn.softmax(logits, axis=1)


if __name__ == "__main__":
    key = jax.random.PRNGKey(0)
    kx, kp = jax.random.split(key)

    N, IN_DIMS = 2, 4
    OUT_DIMS = R * C

    x = jax.random.normal(kx, (N, IN_DIMS, R, C), jnp.float32)
    params = init_params(kp, IN_DIMS, POLICY_HEAD_FILTERS, R, C, OUT_DIMS)
    packed = pack_params(params, R, C)        # hoisted, one-time repacking

    out = policy_head_forward(x, packed)
    out = jax.block_until_ready(out)

    ref = reference_forward(x, params)
    assert out.shape == (N, OUT_DIMS)
    # Tolerance accounts for TPU MXU f32 matmul emulation differences between
    # the Pallas and XLA dot paths; any semantic error would be >> 1e-3.
    assert jnp.allclose(out, ref, atol=1e-3, rtol=1e-3)
    assert jnp.allclose(jnp.sum(out, axis=1), 1.0, atol=1e-5)

    print("KERNEL_OK")
</pallas_src>

<mosaic_0001>
module attributes {stable_mosaic.version = 11 : i64} {
  func.func @policy_head_kernel(%arg0: memref<2x64xf32, #tpu.memory_space<vmem>>, %arg1: memref<64x128xf32, #tpu.memory_space<vmem>>, %arg2: memref<128x8xf32, #tpu.memory_space<vmem>>, %arg3: memref<8x128xf32, #tpu.memory_space<vmem>>, %arg4: memref<1x8xf32, #tpu.memory_space<vmem>>, %arg5: memref<1x128xf32, #tpu.memory_space<vmem>>, %arg6: memref<128x16xf32, #tpu.memory_space<vmem>>, %arg7: memref<1x16xf32, #tpu.memory_space<vmem>>, %arg8: memref<2x16xf32, #tpu.memory_space<vmem>>) attributes {dimension_semantics = [], scalar_prefetch = 0 : i64, scratch_operands = 0 : i64, tpu.core_type = #tpu.core_type<tc>} {
    %c0 = arith.constant 0 : index
    %c0_0 = arith.constant 0 : index
    %0 = vector.load %arg0[%c0, %c0_0] : memref<2x64xf32, #tpu.memory_space<vmem>>, vector<2x64xf32>
    %c0_1 = arith.constant 0 : index
    %c0_2 = arith.constant 0 : index
    %1 = vector.load %arg1[%c0_1, %c0_2] : memref<64x128xf32, #tpu.memory_space<vmem>>, vector<64x128xf32>
    %cst = arith.constant dense<0.000000e+00> : vector<2x128xf32>
    %2 = tpu.matmul %0, %1, %cst {dimension_numbers = #tpu.dot_dimension_numbers<[1], [0], [0], [1], [0, 0, 1, 1], [], []>} : vector<2x64xf32>, vector<64x128xf32>, vector<2x128xf32> -> vector<2x128xf32>
    %c0_3 = arith.constant 0 : index
    %c0_4 = arith.constant 0 : index
    %3 = vector.load %arg2[%c0_3, %c0_4] : memref<128x8xf32, #tpu.memory_space<vmem>>, vector<128x8xf32>
    %cst_5 = arith.constant dense<0.000000e+00> : vector<2x8xf32>
    %4 = tpu.matmul %2, %3, %cst_5 {dimension_numbers = #tpu.dot_dimension_numbers<[1], [0], [0], [1], [0, 0, 1, 1], [], []>} : vector<2x128xf32>, vector<128x8xf32>, vector<2x8xf32> -> vector<2x8xf32>
    %cst_6 = arith.constant dense<0.000000e+00> : vector<8xf32>
    %5 = vector.multi_reduction <add>, %4, %cst_6 [0] : vector<2x8xf32> to vector<8xf32>
    %6 = vector.shape_cast %5 : vector<8xf32> to vector<1x8xf32>
    %cst_7 = arith.constant 3.200000e+01 : f32
    %7 = vector.broadcast %cst_7 : f32 to vector<1x8xf32>
    %8 = arith.divf %6, %7 : vector<1x8xf32>
    %c0_8 = arith.constant 0 : index
    %c0_9 = arith.constant 0 : index
    %9 = vector.load %arg3[%c0_8, %c0_9] : memref<8x128xf32, #tpu.memory_space<vmem>>, vector<8x128xf32>
    %cst_10 = arith.constant dense<0.000000e+00> : vector<1x128xf32>
    %10 = tpu.matmul %8, %9, %cst_10 {dimension_numbers = #tpu.dot_dimension_numbers<[1], [0], [0], [1], [0, 0, 1, 1], [], []>} : vector<1x8xf32>, vector<8x128xf32>, vector<1x128xf32> -> vector<1x128xf32>
    %11 = vector.broadcast %10 : vector<1x128xf32> to vector<2x128xf32>
    %12 = arith.subf %2, %11 : vector<2x128xf32>
    %13 = arith.mulf %12, %12 : vector<2x128xf32>
    %c0_11 = arith.constant 0 : index
    %c0_12 = arith.constant 0 : index
    %14 = vector.load %arg2[%c0_11, %c0_12] : memref<128x8xf32, #tpu.memory_space<vmem>>, vector<128x8xf32>
    %cst_13 = arith.constant dense<0.000000e+00> : vector<2x8xf32>
    %15 = tpu.matmul %13, %14, %cst_13 {dimension_numbers = #tpu.dot_dimension_numbers<[1], [0], [0], [1], [0, 0, 1, 1], [], []>} : vector<2x128xf32>, vector<128x8xf32>, vector<2x8xf32> -> vector<2x8xf32>
    %cst_14 = arith.constant dense<0.000000e+00> : vector<8xf32>
    %16 = vector.multi_reduction <add>, %15, %cst_14 [0] : vector<2x8xf32> to vector<8xf32>
    %17 = vector.shape_cast %16 : vector<8xf32> to vector<1x8xf32>
    %cst_15 = arith.constant 3.200000e+01 : f32
    %18 = vector.broadcast %cst_15 : f32 to vector<1x8xf32>
    %19 = arith.divf %17, %18 : vector<1x8xf32>
    %c0_16 = arith.constant 0 : index
    %c0_17 = arith.constant 0 : index
    %20 = vector.load %arg4[%c0_16, %c0_17] : memref<1x8xf32, #tpu.memory_space<vmem>>, vector<1x8xf32>
    %cst_18 = arith.constant 9.99999974E-6 : f32
    %21 = vector.broadcast %cst_18 : f32 to vector<1x8xf32>
    %22 = arith.addf %19, %21 : vector<1x8xf32>
    %23 = math.rsqrt %22 : vector<1x8xf32>
    %24 = arith.mulf %20, %23 : vector<1x8xf32>
    %c0_19 = arith.constant 0 : index
    %c0_20 = arith.constant 0 : index
    %25 = vector.load %arg3[%c0_19, %c0_20] : memref<8x128xf32, #tpu.memory_space<vmem>>, vector<8x128xf32>
    %cst_21 = arith.constant dense<0.000000e+00> : vector<1x128xf32>
    %26 = tpu.matmul %24, %25, %cst_21 {dimension_numbers = #tpu.dot_dimension_numbers<[1], [0], [0], [1], [0, 0, 1, 1], [], []>} : vector<1x8xf32>, vector<8x128xf32>, vector<1x128xf32> -> vector<1x128xf32>
    %27 = vector.broadcast %26 : vector<1x128xf32> to vector<2x128xf32>
    %28 = arith.mulf %12, %27 : vector<2x128xf32>
    %c0_22 = arith.constant 0 : index
    %c0_23 = arith.constant 0 : index
    %29 = vector.load %arg5[%c0_22, %c0_23] : memref<1x128xf32, #tpu.memory_space<vmem>>, vector<1x128xf32>
    %30 = vector.broadcast %29 : vector<1x128xf32> to vector<2x128xf32>
    %31 = arith.addf %28, %30 : vector<2x128xf32>
    %cst_24 = arith.constant 0.000000e+00 : f32
    %32 = vector.broadcast %cst_24 : f32 to vector<2x128xf32>
    %33 = arith.maximumf %31, %32 : vector<2x128xf32>
    %c0_25 = arith.constant 0 : index
    %c0_26 = arith.constant 0 : index
    %34 = vector.load %arg6[%c0_25, %c0_26] : memref<128x16xf32, #tpu.memory_space<vmem>>, vector<128x16xf32>
    %cst_27 = arith.constant dense<0.000000e+00> : vector<2x16xf32>
    %35 = tpu.matmul %33, %34, %cst_27 {dimension_numbers = #tpu.dot_dimension_numbers<[1], [0], [0], [1], [0, 0, 1, 1], [], []>} : vector<2x128xf32>, vector<128x16xf32>, vector<2x16xf32> -> vector<2x16xf32>
    %c0_28 = arith.constant 0 : index
    %c0_29 = arith.constant 0 : index
    %36 = vector.load %arg7[%c0_28, %c0_29] : memref<1x16xf32, #tpu.memory_space<vmem>>, vector<1x16xf32>
    %37 = vector.broadcast %36 : vector<1x16xf32> to vector<2x16xf32>
    %38 = arith.addf %35, %37 : vector<2x16xf32>
    %cst_30 = arith.constant dense<0xFF800000> : vector<2xf32>
    %39 = vector.multi_reduction <maximumf>, %38, %cst_30 [1] : vector<2x16xf32> to vector<2xf32>
    %40 = vector.shape_cast %39 : vector<2xf32> to vector<2x1xf32>
    %41 = vector.broadcast %40 : vector<2x1xf32> to vector<2x16xf32>
    %42 = arith.subf %38, %41 : vector<2x16xf32>
    %43 = math.exp %42 : vector<2x16xf32>
    %cst_31 = arith.constant dense<0.000000e+00> : vector<2xf32>
    %44 = vector.multi_reduction <add>, %43, %cst_31 [1] : vector<2x16xf32> to vector<2xf32>
    %45 = vector.shape_cast %44 : vector<2xf32> to vector<2x1xf32>
    %46 = tpu.reciprocal %45 {approx = true} : vector<2x1xf32> -> vector<2x1xf32>
    %47 = arith.mulf %45, %46 : vector<2x1xf32>
    %cst_32 = arith.constant 2.000000e+00 : f32
    %48 = vector.broadcast %cst_32 : f32 to vector<2x1xf32>
    %49 = arith.subf %48, %47 : vector<2x1xf32>
    %50 = arith.mulf %46, %49 : vector<2x1xf32>
    %51 = vector.broadcast %50 : vector<2x1xf32> to vector<2x16xf32>
    %52 = arith.mulf %43, %51 : vector<2x16xf32>
    %c0_33 = arith.constant 0 : index
    %c0_34 = arith.constant 0 : index
    %53 = vector.load %arg8[%c0_33, %c0_34] : memref<2x16xf32, #tpu.memory_space<vmem>>, vector<2x16xf32>
    tpu.vector_store %arg8[%c0_33, %c0_34], %52 {strides = array<i32>} : memref<2x16xf32, #tpu.memory_space<vmem>>, vector<2x16xf32>,
    return
  }
}

</mosaic_0001>

<llo_original>
// kernel: tpu_custom_call.1
$region0: #{tpu_custom_call.1}
  #allocation0 [shape = 'u32[]', space=smem, size = 0x4, offset = 0x4, fixed_abs, tag = 'smem constant byte address 0x4 - core index']
  #allocation1 [shape = 'u32[144,128]{1,0:T(1,128)}', space=vmem, size = 0x12000, scoped, tag = 'internal scratch']
  %s0 = inlined_call_operand.vmem [shape: f32[2,64], index: 0, kind: input, shape index: {}]
  %s1 = inlined_call_operand.vmem [shape: f32[64,128], index: 1, kind: input, shape index: {}]
  %s2 = inlined_call_operand.vmem [shape: f32[128,8], index: 2, kind: input, shape index: {}]
  %s3 = inlined_call_operand.vmem [shape: f32[8,128], index: 3, kind: input, shape index: {}]
  %s4 = inlined_call_operand.vmem [shape: f32[1,8], index: 4, kind: input, shape index: {}]
  %s5 = inlined_call_operand.vmem [shape: f32[1,128], index: 5, kind: input, shape index: {}]
  %s6 = inlined_call_operand.vmem [shape: f32[128,16], index: 6, kind: input, shape index: {}]
  %s7 = inlined_call_operand.vmem [shape: f32[1,16], index: 7, kind: input, shape index: {}]
  %s8 = inlined_call_operand.hbm [shape: f32[2,16], index: 8, kind: output, shape index: {}]
  %s9 = sld [smem:[#allocation0]]
  $region42: #{tpu_custom_call.1} parent=0
    _
  %s11 = ssub.s32 1, %s9
  %s12 = scalar_select 0, %s11, %s9
  $region1: #{tpu_custom_call.1} parent=0
    #allocation2 [shape = 'u8[1024]{0}', space=vmem, size = 0x400, scoped, tag = 'output window, operand 0, single buffered']
    #allocation3 [shape = 's32[1]{0}', space=sflag, size = 0x4, scoped, tag = 'scoped memory for tpu_custom_call.1']
    %13 = vsyncpa [#allocation3], 0
    // Predicated region
    $region2: #{tpu_custom_call.1} parent=1 // pred_check
      _
    $region3: #{tpu_custom_call.1} parent=1 // pred_check_branch
      %15 = sbr.rel (0) target = $region5
    $region4: #{tpu_custom_call.1} parent=1 // pred_region
      _
    $region5: #{tpu_custom_call.1} parent=1 // pred_fallthru
      _
    // Predicated region
    $region6: #{tpu_custom_call.1} parent=1 // pred_check
      _
    $region7: #{tpu_custom_call.1} parent=1 // pred_check_branch
      %17 = sbr.rel (0) target = $region9
    $region8: #{tpu_custom_call.1} parent=1 // pred_region
      _
    $region9: #{tpu_custom_call.1} parent=1 // pred_fallthru
      _
    // Predicated region
    $region10: #{tpu_custom_call.1} parent=1 // pred_check
      _
    $region11: #{tpu_custom_call.1} parent=1 // pred_check_branch
      %19 = sbr.rel (0) target = $region13
    $region12: #{tpu_custom_call.1} parent=1 // pred_region
      _
    $region13: #{tpu_custom_call.1} parent=1 // pred_fallthru
      _
    // Predicated region
    $region14: #{tpu_custom_call.1} parent=1 // pred_check
      _
    $region15: #{tpu_custom_call.1} parent=1 // pred_check_branch
      %21 = sbr.rel (0) target = $region17
    $region16: #{tpu_custom_call.1} parent=1 // pred_region
      _
    $region17: #{tpu_custom_call.1} parent=1 // pred_fallthru
      _
    // Predicated region
    $region18: #{tpu_custom_call.1} parent=1 // pred_check
      _
    $region19: #{tpu_custom_call.1} parent=1 // pred_check_branch
      %23 = sbr.rel (0) target = $region21
    $region20: #{tpu_custom_call.1} parent=1 // pred_region
      _
    $region21: #{tpu_custom_call.1} parent=1 // pred_fallthru
      _
    // Predicated region
    $region22: #{tpu_custom_call.1} parent=1 // pred_check
      _
    $region23: #{tpu_custom_call.1} parent=1 // pred_check_branch
      %25 = sbr.rel (0) target = $region25
    $region24: #{tpu_custom_call.1} parent=1 // pred_region
      _
    $region25: #{tpu_custom_call.1} parent=1 // pred_fallthru
      _
    // Predicated region
    $region26: #{tpu_custom_call.1} parent=1 // pred_check
      _
    $region27: #{tpu_custom_call.1} parent=1 // pred_check_branch
      %27 = sbr.rel (0) target = $region29
    $region28: #{tpu_custom_call.1} parent=1 // pred_region
      _
    $region29: #{tpu_custom_call.1} parent=1 // pred_fallthru
      _
    // Predicated region
    $region30: #{tpu_custom_call.1} parent=1 // pred_check
      _
    $region31: #{tpu_custom_call.1} parent=1 // pred_check_branch
      %29 = sbr.rel (0) target = $region33
    $region32: #{tpu_custom_call.1} parent=1 // pred_region
      _
    $region33: #{tpu_custom_call.1} parent=1 // pred_fallthru
      _
    %v30 = vld [vmem:[%s0] sm:$0x3]
    %v31 = vld [vmem:[%s1] sm:$0xff]
    %v32 = vld [vmem:[%s1 + $0x8] sm:$0xff]
    %v33 = vld [vmem:[%s1 + $0x10] sm:$0xff]
    %v34 = vld [vmem:[%s1 + $0x18] sm:$0xff]
    %v35 = vld [vmem:[%s1 + $0x20] sm:$0xff]
    %v36 = vld [vmem:[%s1 + $0x28] sm:$0xff]
    %v37 = vld [vmem:[%s1 + $0x30] sm:$0xff]
    %v38 = vld [vmem:[%s1 + $0x38] sm:$0xff]
    %vm39 = vcmask 523264
    %v41 = vsel %vm39, %v30, 0
    %43 = vmatprep.subr.mxu0 0.0
    %44 = vmatpush1.msra.mxu0 0.0
    %45 = vmatprep.subr.mxu0 0.0
    %46 = vmatpush1.msra.mxu0 0.0
    %47 = vmatprep.subr.mxu0 0.0
    %48 = vmatpush1.msra.mxu0 0.0
    %49 = vmatprep.subr.mxu0 0.0
    %50 = vmatpush1.msra.mxu0 0.0
    %51 = vmatprep.subr.mxu0 0.0
    %52 = vmatpush1.msra.mxu0 0.0
    %53 = vmatprep.subr.mxu0 0.0
    %54 = vmatpush1.msra.mxu0 0.0
    %55 = vmatprep.subr.mxu0 0.0
    %56 = vmatpush1.msra.mxu0 0.0
    %57 = vmatprep.subr.mxu0 0.0
    %58 = vmatpush1.msra.mxu0 0.0
    %59 = vmatprep.subr.mxu0 0.0
    %60 = vmatpush1.msra.mxu0 %v38
    %61 = vmatprep.subr.mxu0 0.0
    %62 = vmatpush1.msra.mxu0 %v37
    %63 = vmatprep.subr.mxu0 0.0
    %64 = vmatpush1.msra.mxu0 %v36
    %65 = vmatprep.subr.mxu0 0.0
    %66 = vmatpush1.msra.mxu0 %v35
    %67 = vmatprep.subr.mxu0 0.0
    %68 = vmatpush1.msra.mxu0 %v34
    %69 = vmatprep.subr.mxu0 0.0
    %70 = vmatpush1.msra.mxu0 %v33
    %71 = vmatprep.subr.mxu0 0.0
    %72 = vmatpush1.msra.mxu0 %v32
    %73 = vmatprep.subr.mxu0 0.0
    %74 = vmatpush1.msra.mxu0 %v31
    %75 = vmatprep.subr.mxu0 0.0
    %76 = vmatpush2.msra.mxu0 0.0
    %77 = vmatprep.subr.mxu0 0.0
    %78 = vmatpush2.msra.mxu0 0.0
    %79 = vmatprep.subr.mxu0 0.0
    %80 = vmatpush2.msra.mxu0 0.0
    %81 = vmatprep.subr.mxu0 0.0
    %82 = vmatpush2.msra.mxu0 0.0
    %83 = vmatprep.subr.mxu0 0.0
    %84 = vmatpush2.msra.mxu0 0.0
    %85 = vmatprep.subr.mxu0 0.0
    %86 = vmatpush2.msra.mxu0 0.0
    %87 = vmatprep.subr.mxu0 0.0
    %88 = vmatpush2.msra.mxu0 0.0
    %89 = vmatprep.subr.mxu0 0.0
    %90 = vmatpush2.msra.mxu0 0.0
    %91 = vmatprep.subr.mxu0 0.0
    %92 = vmatpush2.msra.mxu0 0.0
    %93 = vmatprep.subr.mxu0 0.0
    %94 = vmatpush2.msra.mxu0 0.0
    %95 = vmatprep.subr.mxu0 0.0
    %96 = vmatpush2.msra.mxu0 0.0
    %97 = vmatprep.subr.mxu0 0.0
    %98 = vmatpush2.msra.mxu0 0.0
    %99 = vmatprep.subr.mxu0 0.0
    %100 = vmatpush2.msra.mxu0 0.0
    %101 = vmatprep.subr.mxu0 0.0
    %102 = vmatpush2.msra.mxu0 0.0
    %103 = vmatprep.subr.mxu0 0.0
    %104 = vmatpush2.msra.mxu0 0.0
    %105 = vmatprep.subr.mxu0 0.0
    %106 = vmatpush2.msra.mxu0 0.0
    %107 = vmatprep.mubr.f32.mxu0 0.0
    %108 = vmatmul.mubr.f32.gmra.mxu0 %v41
    %v109 = vpop.f32.mrf.mxu0
    %v110 = vadd.f32 0.0, %v109
    %v111 = vpop.f32.mrf.mxu0
    %112 = vdwg.mxu0
    %v113 = vld [vmem:[%s2] sm:$0xff]
    %v114 = vld [vmem:[%s2 + $0x8] sm:$0xff]
    %v115 = vld [vmem:[%s2 + $0x10] sm:$0xff]
    %v116 = vld [vmem:[%s2 + $0x18] sm:$0xff]
    %v117 = vld [vmem:[%s2 + $0x20] sm:$0xff]
    %v118 = vld [vmem:[%s2 + $0x28] sm:$0xff]
    %v119 = vld [vmem:[%s2 + $0x30] sm:$0xff]
    %v120 = vld [vmem:[%s2 + $0x38] sm:$0xff]
    %v121 = vld [vmem:[%s2 + $0x40] sm:$0xff]
    %v122 = vld [vmem:[%s2 + $0x48] sm:$0xff]
    %v123 = vld [vmem:[%s2 + $0x50] sm:$0xff]
    %v124 = vld [vmem:[%s2 + $0x58] sm:$0xff]
    %v125 = vld [vmem:[%s2 + $0x60] sm:$0xff]
    %v126 = vld [vmem:[%s2 + $0x68] sm:$0xff]
    %v127 = vld [vmem:[%s2 + $0x70] sm:$0xff]
    %v128 = vld [vmem:[%s2 + $0x78] sm:$0xff]
    %129 = vmatprep.subr.mxu0 0.0
    %130 = vmatpush1.msra.mxu0 %v128
    %131 = vmatprep.subr.mxu0 0.0
    %132 = vmatpush1.msra.mxu0 %v127
    %133 = vmatprep.subr.mxu0 0.0
    %134 = vmatpush1.msra.mxu0 %v126
    %135 = vmatprep.subr.mxu0 0.0
    %136 = vmatpush1.msra.mxu0 %v125
    %137 = vmatprep.subr.mxu0 0.0
    %138 = vmatpush1.msra.mxu0 %v124
    %139 = vmatprep.subr.mxu0 0.0
    %140 = vmatpush1.msra.mxu0 %v123
    %141 = vmatprep.subr.mxu0 0.0
    %142 = vmatpush1.msra.mxu0 %v122
    %143 = vmatprep.subr.mxu0 0.0
    %144 = vmatpush1.msra.mxu0 %v121
    %145 = vmatprep.subr.mxu0 0.0
    %146 = vmatpush1.msra.mxu0 %v120
    %147 = vmatprep.subr.mxu0 0.0
    %148 = vmatpush1.msra.mxu0 %v119
    %149 = vmatprep.subr.mxu0 0.0
    %150 = vmatpush1.msra.mxu0 %v118
    %151 = vmatprep.subr.mxu0 0.0
    %152 = vmatpush1.msra.mxu0 %v117
    %153 = vmatprep.subr.mxu0 0.0
    %154 = vmatpush1.msra.mxu0 %v116
    %155 = vmatprep.subr.mxu0 0.0
    %156 = vmatpush1.msra.mxu0 %v115
    %157 = vmatprep.subr.mxu0 0.0
    %158 = vmatpush1.msra.mxu0 %v114
    %159 = vmatprep.subr.mxu0 0.0
    %160 = vmatpush1.msra.mxu0 %v113
    %161 = vmatprep.subr.mxu0 0.0
    %162 = vmatpush2.msra.mxu0 0.0
    %163 = vmatprep.subr.mxu0 0.0
    %164 = vmatpush2.msra.mxu0 0.0
    %165 = vmatprep.subr.mxu0 0.0
    %166 = vmatpush2.msra.mxu0 0.0
    %167 = vmatprep.subr.mxu0 0.0
    %168 = vmatpush2.msra.mxu0 0.0
    %169 = vmatprep.subr.mxu0 0.0
    %170 = vmatpush2.msra.mxu0 0.0
    %171 = vmatprep.subr.mxu0 0.0
    %172 = vmatpush2.msra.mxu0 0.0
    %173 = vmatprep.subr.mxu0 0.0
    %174 = vmatpush2.msra.mxu0 0.0
    %175 = vmatprep.subr.mxu0 0.0
    %176 = vmatpush2.msra.mxu0 0.0
    %177 = vmatprep.subr.mxu0 0.0
    %178 = vmatpush2.msra.mxu0 0.0
    %179 = vmatprep.subr.mxu0 0.0
    %180 = vmatpush2.msra.mxu0 0.0
    %181 = vmatprep.subr.mxu0 0.0
    %182 = vmatpush2.msra.mxu0 0.0
    %183 = vmatprep.subr.mxu0 0.0
    %184 = vmatpush2.msra.mxu0 0.0
    %185 = vmatprep.subr.mxu0 0.0
    %186 = vmatpush2.msra.mxu0 0.0
    %187 = vmatprep.subr.mxu0 0.0
    %188 = vmatpush2.msra.mxu0 0.0
    %189 = vmatprep.subr.mxu0 0.0
    %190 = vmatpush2.msra.mxu0 0.0
    %191 = vmatprep.subr.mxu0 0.0
    %192 = vmatpush2.msra.mxu0 0.0
    %193 = vmatprep.mubr.f32.mxu0 0.0
    %194 = vmatmul.mubr.f32.gmra.mxu0 %v110
    %v195 = vpop.f32.mrf.mxu0
    %v196 = vadd.f32 0.0, %v195
    %v197 = vpop.f32.mrf.mxu0
    %198 = vdwg.mxu0
    %vm199 = vcmask 58368
    %v200 = vsel %vm199, %v196, 0.0
    %v201 = vrot.slane %v200, 4
    %v202 = vadd.f32 %v200, %v201
    %v203 = vrot.slane %v202, 2
    %v204 = vadd.f32 %v202, %v203
    %v205 = vrot.slane %v204, 1
    %v206 = vadd.f32 %v204, %v205
    %v207 = vrcp.pop 32.0
    %v208 = vmul.f32 %v206, %v207
    %v209 = vld [vmem:[%s3] sm:$0xff]
    %vm210 = vcmask 64512
    %v212 = vsel %vm210, %v208, 0
    %214 = vmatprep.subr.mxu0 0.0
    %215 = vmatpush1.msra.mxu0 0.0
    %216 = vmatprep.subr.mxu0 0.0
    %217 = vmatpush1.msra.mxu0 0.0
    %218 = vmatprep.subr.mxu0 0.0
    %219 = vmatpush1.msra.mxu0 0.0
    %220 = vmatprep.subr.mxu0 0.0
    %221 = vmatpush1.msra.mxu0 0.0
    %222 = vmatprep.subr.mxu0 0.0
    %223 = vmatpush1.msra.mxu0 0.0
    %224 = vmatprep.subr.mxu0 0.0
    %225 = vmatpush1.msra.mxu0 0.0
    %226 = vmatprep.subr.mxu0 0.0
    %227 = vmatpush1.msra.mxu0 0.0
    %228 = vmatprep.subr.mxu0 0.0
    %229 = vmatpush1.msra.mxu0 0.0
    %230 = vmatprep.subr.mxu0 0.0
    %231 = vmatpush1.msra.mxu0 0.0
    %232 = vmatprep.subr.mxu0 0.0
    %233 = vmatpush1.msra.mxu0 0.0
    %234 = vmatprep.subr.mxu0 0.0
    %235 = vmatpush1.msra.mxu0 0.0
    %236 = vmatprep.subr.mxu0 0.0
    %237 = vmatpush1.msra.mxu0 0.0
    %238 = vmatprep.subr.mxu0 0.0
    %239 = vmatpush1.msra.mxu0 0.0
    %240 = vmatprep.subr.mxu0 0.0
    %241 = vmatpush1.msra.mxu0 0.0
    %242 = vmatprep.subr.mxu0 0.0
    %243 = vmatpush1.msra.mxu0 0.0
    %244 = vmatprep.subr.mxu0 0.0
    %245 = vmatpush1.msra.mxu0 %v209
    %246 = vmatprep.subr.mxu0 0.0
    %247 = vmatpush2.msra.mxu0 0.0
    %248 = vmatprep.subr.mxu0 0.0
    %249 = vmatpush2.msra.mxu0 0.0
    %250 = vmatprep.subr.mxu0 0.0
    %251 = vmatpush2.msra.mxu0 0.0
    %252 = vmatprep.subr.mxu0 0.0
    %253 = vmatpush2.msra.mxu0 0.0
    %254 = vmatprep.subr.mxu0 0.0
    %255 = vmatpush2.msra.mxu0 0.0
    %256 = vmatprep.subr.mxu0 0.0
    %257 = vmatpush2.msra.mxu0 0.0
    %258 = vmatprep.subr.mxu0 0.0
    %259 = vmatpush2.msra.mxu0 0.0
    %260 = vmatprep.subr.mxu0 0.0
    %261 = vmatpush2.msra.mxu0 0.0
    %262 = vmatprep.subr.mxu0 0.0
    %263 = vmatpush2.msra.mxu0 0.0
    %264 = vmatprep.subr.mxu0 0.0
    %265 = vmatpush2.msra.mxu0 0.0
    %266 = vmatprep.subr.mxu0 0.0
    %267 = vmatpush2.msra.mxu0 0.0
    %268 = vmatprep.subr.mxu0 0.0
    %269 = vmatpush2.msra.mxu0 0.0
    %270 = vmatprep.subr.mxu0 0.0
    %271 = vmatpush2.msra.mxu0 0.0
    %272 = vmatprep.subr.mxu0 0.0
    %273 = vmatpush2.msra.mxu0 0.0
    %274 = vmatprep.subr.mxu0 0.0
    %275 = vmatpush2.msra.mxu0 0.0
    %276 = vmatprep.subr.mxu0 0.0
    %277 = vmatpush2.msra.mxu0 0.0
    %278 = vmatprep.mubr.f32.mxu0 0.0
    %279 = vmatmul.mubr.f32.gmra.mxu0 %v212
    %v280 = vpop.f32.mrf.mxu0
    %v281 = vadd.f32 0.0, %v280
    %v282 = vpop.f32.mrf.mxu0
    %283 = vdwg.mxu0
    %v284 = vlaneseq
    %v285 = vshrl.u32 %v284, 7
    %v286 = vsub.s32 0, %v285
    %v287 = vrot.slane %v281, %v286
    %v288 = vsub.f32 %v110, %v287
    %v289 = vmul.f32 %v288, %v288
    %290 = vmatprep.subr.mxu0 0.0
    %291 = vmatpush1.msra.mxu0 %v128
    %292 = vmatprep.subr.mxu0 0.0
    %293 = vmatpush1.msra.mxu0 %v127
    %294 = vmatprep.subr.mxu0 0.0
    %295 = vmatpush1.msra.mxu0 %v126
    %296 = vmatprep.subr.mxu0 0.0
    %297 = vmatpush1.msra.mxu0 %v125
    %298 = vmatprep.subr.mxu0 0.0
    %299 = vmatpush1.msra.mxu0 %v124
    %300 = vmatprep.subr.mxu0 0.0
    %301 = vmatpush1.msra.mxu0 %v123
    %302 = vmatprep.subr.mxu0 0.0
    %303 = vmatpush1.msra.mxu0 %v122
    %304 = vmatprep.subr.mxu0 0.0
    %305 = vmatpush1.msra.mxu0 %v121
    %306 = vmatprep.subr.mxu0 0.0
    %307 = vmatpush1.msra.mxu0 %v120
    %308 = vmatprep.subr.mxu0 0.0
    %309 = vmatpush1.msra.mxu0 %v119
    %310 = vmatprep.subr.mxu0 0.0
    %311 = vmatpush1.msra.mxu0 %v118
    %312 = vmatprep.subr.mxu0 0.0
    %313 = vmatpush1.msra.mxu0 %v117
    %314 = vmatprep.subr.mxu0 0.0
    %315 = vmatpush1.msra.mxu0 %v116
    %316 = vmatprep.subr.mxu0 0.0
    %317 = vmatpush1.msra.mxu0 %v115
    %318 = vmatprep.subr.mxu0 0.0
    %319 = vmatpush1.msra.mxu0 %v114
    %320 = vmatprep.subr.mxu0 0.0
    %321 = vmatpush1.msra.mxu0 %v113
    %322 = vmatprep.subr.mxu0 0.0
    %323 = vmatpush2.msra.mxu0 0.0
    %324 = vmatprep.subr.mxu0 0.0
    %325 = vmatpush2.msra.mxu0 0.0
    %326 = vmatprep.subr.mxu0 0.0
    %327 = vmatpush2.msra.mxu0 0.0
    %328 = vmatprep.subr.mxu0 0.0
    %329 = vmatpush2.msra.mxu0 0.0
    %330 = vmatprep.subr.mxu0 0.0
    %331 = vmatpush2.msra.mxu0 0.0
    %332 = vmatprep.subr.mxu0 0.0
    %333 = vmatpush2.msra.mxu0 0.0
    %334 = vmatprep.subr.mxu0 0.0
    %335 = vmatpush2.msra.mxu0 0.0
    %336 = vmatprep.subr.mxu0 0.0
    %337 = vmatpush2.msra.mxu0 0.0
    %338 = vmatprep.subr.mxu0 0.0
    %339 = vmatpush2.msra.mxu0 0.0
    %340 = vmatprep.subr.mxu0 0.0
    %341 = vmatpush2.msra.mxu0 0.0
    %342 = vmatprep.subr.mxu0 0.0
    %343 = vmatpush2.msra.mxu0 0.0
    %344 = vmatprep.subr.mxu0 0.0
    %345 = vmatpush2.msra.mxu0 0.0
    %346 = vmatprep.subr.mxu0 0.0
    %347 = vmatpush2.msra.mxu0 0.0
    %348 = vmatprep.subr.mxu0 0.0
    %349 = vmatpush2.msra.mxu0 0.0
    %350 = vmatprep.subr.mxu0 0.0
    %351 = vmatpush2.msra.mxu0 0.0
    %352 = vmatprep.subr.mxu0 0.0
    %353 = vmatpush2.msra.mxu0 0.0
    %354 = vmatprep.mubr.f32.mxu0 0.0
    %355 = vmatmul.mubr.f32.gmra.mxu0 %v289
    %v356 = vpop.f32.mrf.mxu0
    %v357 = vadd.f32 0.0, %v356
    %v358 = vpop.f32.mrf.mxu0
    %359 = vdwg.mxu0
    %v360 = vsel %vm199, %v357, 0.0
    %v361 = vrot.slane %v360, 4
    %v362 = vadd.f32 %v360, %v361
    %v363 = vrot.slane %v362, 2
    %v364 = vadd.f32 %v362, %v363
    %v365 = vrot.slane %v364, 1
    %v366 = vadd.f32 %v364, %v365
    %v367 = vmul.f32 %v366, %v207
    %v368 = vld [vmem:[%s4] sm:$0x1]
    %v369 = vadd.f32 %v367, 1e-05
    %v370 = vrsqrt.pop %v369
    %v371 = vmul.f32 %v368, %v370
    %v373 = vsel %vm210, %v371, 0
    %375 = vmatprep.subr.mxu0 0.0
    %376 = vmatpush1.msra.mxu0 0.0
    %377 = vmatprep.subr.mxu0 0.0
    %378 = vmatpush1.msra.mxu0 0.0
    %379 = vmatprep.subr.mxu0 0.0
    %380 = vmatpush1.msra.mxu0 0.0
    %381 = vmatprep.subr.mxu0 0.0
    %382 = vmatpush1.msra.mxu0 0.0
    %383 = vmatprep.subr.mxu0 0.0
    %384 = vmatpush1.msra.mxu0 0.0
    %385 = vmatprep.subr.mxu0 0.0
    %386 = vmatpush1.msra.mxu0 0.0
    %387 = vmatprep.subr.mxu0 0.0
    %388 = vmatpush1.msra.mxu0 0.0
    %389 = vmatprep.subr.mxu0 0.0
    %390 = vmatpush1.msra.mxu0 0.0
    %391 = vmatprep.subr.mxu0 0.0
    %392 = vmatpush1.msra.mxu0 0.0
    %393 = vmatprep.subr.mxu0 0.0
    %394 = vmatpush1.msra.mxu0 0.0
    %395 = vmatprep.subr.mxu0 0.0
    %396 = vmatpush1.msra.mxu0 0.0
    %397 = vmatprep.subr.mxu0 0.0
    %398 = vmatpush1.msra.mxu0 0.0
    %399 = vmatprep.subr.mxu0 0.0
    %400 = vmatpush1.msra.mxu0 0.0
    %401 = vmatprep.subr.mxu0 0.0
    %402 = vmatpush1.msra.mxu0 0.0
    %403 = vmatprep.subr.mxu0 0.0
    %404 = vmatpush1.msra.mxu0 0.0
    %405 = vmatprep.subr.mxu0 0.0
    %406 = vmatpush1.msra.mxu0 %v209
    %407 = vmatprep.subr.mxu0 0.0
    %408 = vmatpush2.msra.mxu0 0.0
    %409 = vmatprep.subr.mxu0 0.0
    %410 = vmatpush2.msra.mxu0 0.0
    %411 = vmatprep.subr.mxu0 0.0
    %412 = vmatpush2.msra.mxu0 0.0
    %413 = vmatprep.subr.mxu0 0.0
    %414 = vmatpush2.msra.mxu0 0.0
    %415 = vmatprep.subr.mxu0 0.0
    %416 = vmatpush2.msra.mxu0 0.0
    %417 = vmatprep.subr.mxu0 0.0
    %418 = vmatpush2.msra.mxu0 0.0
    %419 = vmatprep.subr.mxu0 0.0
    %420 = vmatpush2.msra.mxu0 0.0
    %421 = vmatprep.subr.mxu0 0.0
    %422 = vmatpush2.msra.mxu0 0.0
    %423 = vmatprep.subr.mxu0 0.0
    %424 = vmatpush2.msra.mxu0 0.0
    %425 = vmatprep.subr.mxu0 0.0
    %426 = vmatpush2.msra.mxu0 0.0
    %427 = vmatprep.subr.mxu0 0.0
    %428 = vmatpush2.msra.mxu0 0.0
    %429 = vmatprep.subr.mxu0 0.0
    %430 = vmatpush2.msra.mxu0 0.0
    %431 = vmatprep.subr.mxu0 0.0
    %432 = vmatpush2.msra.mxu0 0.0
    %433 = vmatprep.subr.mxu0 0.0
    %434 = vmatpush2.msra.mxu0 0.0
    %435 = vmatprep.subr.mxu0 0.0
    %436 = vmatpush2.msra.mxu0 0.0
    %437 = vmatprep.subr.mxu0 0.0
    %438 = vmatpush2.msra.mxu0 0.0
    %439 = vmatprep.mubr.f32.mxu0 0.0
    %440 = vmatmul.mubr.f32.gmra.mxu0 %v373
    %v441 = vpop.f32.mrf.mxu0
    %v442 = vadd.f32 0.0, %v441
    %v443 = vpop.f32.mrf.mxu0
    %444 = vdwg.mxu0
    %v445 = vlaneseq
    %v446 = vshrl.u32 %v445, 7
    %v447 = vsub.s32 0, %v446
    %v448 = vrot.slane %v442, %v447
    %v449 = vmul.f32 %v288, %v448
    %v450 = vld [vmem:[%s5] sm:$0x1]
    %v452 = vlaneseq
    %v453 = vshrl.u32 %v452, 7
    %v454 = vsub.s32 0, %v453
    %v455 = vrot.slane %v450, %v454
    %v457 = vadd.f32 %v449, %v455
    %v458 = vmax.f32 %v457, 0.0
    %v459 = vld [vmem:[%s6] sm:$0xff]
    %v460 = vld [vmem:[%s6 + $0x8] sm:$0xff]
    %v461 = vld [vmem:[%s6 + $0x10] sm:$0xff]
    %v462 = vld [vmem:[%s6 + $0x18] sm:$0xff]
    %v463 = vld [vmem:[%s6 + $0x20] sm:$0xff]
    %v464 = vld [vmem:[%s6 + $0x28] sm:$0xff]
    %v465 = vld [vmem:[%s6 + $0x30] sm:$0xff]
    %v466 = vld [vmem:[%s6 + $0x38] sm:$0xff]
    %v467 = vld [vmem:[%s6 + $0x40] sm:$0xff]
    %v468 = vld [vmem:[%s6 + $0x48] sm:$0xff]
    %v469 = vld [vmem:[%s6 + $0x50] sm:$0xff]
    %v470 = vld [vmem:[%s6 + $0x58] sm:$0xff]
    %v471 = vld [vmem:[%s6 + $0x60] sm:$0xff]
    %v472 = vld [vmem:[%s6 + $0x68] sm:$0xff]
    %v473 = vld [vmem:[%s6 + $0x70] sm:$0xff]
    %v474 = vld [vmem:[%s6 + $0x78] sm:$0xff]
    %v475 = vld [vmem:[%s7] sm:$0x1]
    %v477 = vlaneseq
    %v478 = vshrl.u32 %v477, 7
    %v479 = vsub.s32 0, %v478
    %v480 = vrot.slane %v475, %v479
    %482 = vmatprep.subr.mxu0 0.0
    %483 = vmatpush1.msra.mxu0 %v474
    %484 = vmatprep.subr.mxu0 0.0
    %485 = vmatpush1.msra.mxu0 %v473
    %486 = vmatprep.subr.mxu0 0.0
    %487 = vmatpush1.msra.mxu0 %v472
    %488 = vmatprep.subr.mxu0 0.0
    %489 = vmatpush1.msra.mxu0 %v471
    %490 = vmatprep.subr.mxu0 0.0
    %491 = vmatpush1.msra.mxu0 %v470
    %492 = vmatprep.subr.mxu0 0.0
    %493 = vmatpush1.msra.mxu0 %v469
    %494 = vmatprep.subr.mxu0 0.0
    %495 = vmatpush1.msra.mxu0 %v468
    %496 = vmatprep.subr.mxu0 0.0
    %497 = vmatpush1.msra.mxu0 %v467
    %498 = vmatprep.subr.mxu0 0.0
    %499 = vmatpush1.msra.mxu0 %v466
    %500 = vmatprep.subr.mxu0 0.0
    %501 = vmatpush1.msra.mxu0 %v465
    %502 = vmatprep.subr.mxu0 0.0
    %503 = vmatpush1.msra.mxu0 %v464
    %504 = vmatprep.subr.mxu0 0.0
    %505 = vmatpush1.msra.mxu0 %v463
    %506 = vmatprep.subr.mxu0 0.0
    %507 = vmatpush1.msra.mxu0 %v462
    %508 = vmatprep.subr.mxu0 0.0
    %509 = vmatpush1.msra.mxu0 %v461
    %510 = vmatprep.subr.mxu0 0.0
    %511 = vmatpush1.msra.mxu0 %v460
    %512 = vmatprep.subr.mxu0 0.0
    %513 = vmatpush1.msra.mxu0 %v459
    %514 = vmatprep.subr.mxu0 0.0
    %515 = vmatpush2.msra.mxu0 0.0
    %516 = vmatprep.subr.mxu0 0.0
    %517 = vmatpush2.msra.mxu0 0.0
    %518 = vmatprep.subr.mxu0 0.0
    %519 = vmatpush2.msra.mxu0 0.0
    %520 = vmatprep.subr.mxu0 0.0
    %521 = vmatpush2.msra.mxu0 0.0
    %522 = vmatprep.subr.mxu0 0.0
    %523 = vmatpush2.msra.mxu0 0.0
    %524 = vmatprep.subr.mxu0 0.0
    %525 = vmatpush2.msra.mxu0 0.0
    %526 = vmatprep.subr.mxu0 0.0
    %527 = vmatpush2.msra.mxu0 0.0
    %528 = vmatprep.subr.mxu0 0.0
    %529 = vmatpush2.msra.mxu0 0.0
    %530 = vmatprep.subr.mxu0 0.0
    %531 = vmatpush2.msra.mxu0 0.0
    %532 = vmatprep.subr.mxu0 0.0
    %533 = vmatpush2.msra.mxu0 0.0
    %534 = vmatprep.subr.mxu0 0.0
    %535 = vmatpush2.msra.mxu0 0.0
    %536 = vmatprep.subr.mxu0 0.0
    %537 = vmatpush2.msra.mxu0 0.0
    %538 = vmatprep.subr.mxu0 0.0
    %539 = vmatpush2.msra.mxu0 0.0
    %540 = vmatprep.subr.mxu0 0.0
    %541 = vmatpush2.msra.mxu0 0.0
    %542 = vmatprep.subr.mxu0 0.0
    %543 = vmatpush2.msra.mxu0 0.0
    %544 = vmatprep.subr.mxu0 0.0
    %545 = vmatpush2.msra.mxu0 0.0
    %546 = vmatprep.mubr.f32.mxu0 0.0
    %547 = vmatmul.mubr.f32.gmra.mxu0 %v458
    %v548 = vpop.f32.mrf.mxu0
    %v549 = vadd.f32 %v480, %v548
    %v550 = vpop.f32.mrf.mxu0
    %551 = vdwg.mxu0
    %vm552 = vcmask 123904
    %v553 = vsel %vm552, %v549, -inf
    %554 = vmax.xlane.f32.xlu0 %v553
    %v555 = vpop.xlane.xlu0 %554
    %v556 = vsub.f32 %v549, %v555
    %v557 = vmul.f32 %v556, 1.442695
    %v558 = vpow.pop %v557
    %v559 = vsel %vm552, %v558, 0.0
    %560 = vadd.xlane.f32.xlu0 %v559
    %v561 = vpop.xlane.xlu0 %560
    %v562 = vrcp.pop %v561
    %v563 = vmul.f32 %v561, %v562
    %v564 = vsub.f32 2.0, %v563
    %v565 = vmul.f32 %v562, %v564
    %v566 = vmul.f32 %v558, %v565
    %567 = vst.msk [vmem:[#allocation2] sm:$0x3] %vm552, %v566
    // Predicated region
    $region34: #{tpu_custom_call.1} parent=1 // pred_check
      _
    $region35: #{tpu_custom_call.1} parent=1 // pred_check_branch
      %569 = sbr.rel (0) target = $region37
    $region36: #{tpu_custom_call.1} parent=1 // pred_region
      %s571 = ssub.s32 32, 32
      %572 = vsyncadd [#allocation3], %s571
      %s574 = sshll.u32 [#allocation2], 4
      %s575 = int_to_ptr.vmem [resolvable:$true] %s574
      %577 = dma.vmem_to_hbm [thread:$0]  %s575, 32, %s8, [#allocation3]
    $region37: #{tpu_custom_call.1} parent=1 // pred_fallthru
      _
    // Predicated region
    $region38: #{tpu_custom_call.1} parent=1 // pred_check
      _
    $region39: #{tpu_custom_call.1} parent=1 // pred_check_branch
      %579 = sbr.rel (0) target = $region41
    $region40: #{tpu_custom_call.1} parent=1 // pred_region
      %580 = dma.done [#allocation3], 32
    $region41: #{tpu_custom_call.1} parent=1 // pred_fallthru
      _
    %581 = vsyncpa [#allocation3], 1

</llo_original>
